<compile_context>
chip_gen: v7x
topology: tpu7x:2x2x1
jax: 0.10.0
libtpu: 0.0.40
codegen_flags: <defaults>
</compile_context>

<pallas_src>
import jax
import jax.numpy as jnp
from jax import lax
from jax.experimental import pallas as pl
from jax.experimental.pallas import tpu as pltpu

EPS = 1e-5
HIDDEN = [128, 64, 32, 16]
OUT = 1
LANES = 128           # lane width of weight slab / activations
NUM_FUSED = 4         # 4x (Linear + folded BN + ReLU); 5th Linear handled as NT dot


def _round_up(n, m):
    return ((n + m - 1) // m) * m


def _layer_layout(input_size):
    """K (input width) per fused layer, 8-aligned row offsets into the packed slab."""
    k_in = [input_size, 128, 64, 32]
    k_pad = [_round_up(input_size, 8), 128, 64, 32]
    offs, off = [], 0
    for kp in k_pad:
        offs.append(off)
        off += kp
    return k_in, offs, off            # off == total slab rows


# --------------------------------------------------------------------------
# Kernel: one (tile_b, input_size) activation block through all 5 layers.
# --------------------------------------------------------------------------
def _make_kernel(input_size):
    k_in, offs, _ = _layer_layout(input_size)

    def kernel(x_ref, w_ref, b_ref, o_ref):
        h = x_ref[...]                                    # (tile_b, input_size) f32
        for l in range(NUM_FUSED):                        # Linear(+folded BN)+ReLU
            k, off = k_in[l], offs[l]
            hin = h if h.shape[1] == k else h[:, :k]      # static lane slice
            h = jnp.maximum(
                jnp.dot(hin, w_ref[off:off + k, :],
                        preferred_element_type=jnp.float32)
                + b_ref[l:l + 1, :],
                0.0)                                      # (tile_b, 128), padded cols 0
        # Final Linear, computed "NT" so the prediction lands lane-dense over batch:
        # rows 8..15 of the bias slab hold w_last^T (row 8) and zeros (rows 9..15).
        y8 = lax.dot_general(
            b_ref[8:16, :], h, (((1,), (1,)), ((), ())),
            preferred_element_type=jnp.float32)           # (8, tile_b), row 0 real
        o_ref[...] = y8[0:1, :] + b_ref[4:5, 0:1]         # (1, tile_b) + scalar bias

    return kernel


# --------------------------------------------------------------------------
# Host-side param preprocessing: fold BN into Linear, pack tight slabs.
# --------------------------------------------------------------------------
def _fold_and_pack(params, input_size):
    k_in, offs, total_k = _layer_layout(input_size)
    d_out = [128, 64, 32, 16]
    W = jnp.zeros((total_k, LANES), jnp.float32)          # packed weight slab
    B = jnp.zeros((16, LANES), jnp.float32)               # biases + last-layer row
    for l in range(NUM_FUSED):
        w, b, g, be, m, v = params[6 * l: 6 * l + 6]
        scale = g * lax.rsqrt(v + EPS)                    # (1, d_out)
        W = W.at[offs[l]:offs[l] + k_in[l], :d_out[l]].set(w * scale)
        B = B.at[l, :d_out[l]].set(((b - m) * scale + be)[0])
    w5, b5 = params[-2], params[-1]                       # (16, 1), (1, 1)
    B = B.at[8, :HIDDEN[-1]].set(w5[:, 0])                # w_last^T row (LHS of NT dot)
    B = B.at[4, 0].set(b5[0, 0])                          # final bias scalar
    return W, B


def laptop_price_predictor(x, params, *, max_tile_b=512):
    batch, input_size = x.shape
    assert max_tile_b % 128 == 0, "max_tile_b must be a multiple of 128"

    W, B = _fold_and_pack(params, input_size)

    # Adaptive batch tile: MXU's streamed M dim only needs multiples of 8.
    tile_b = min(max_tile_b, _round_up(batch, 8))
    b_pad = pl.cdiv(batch, tile_b) * tile_b

    x_in = x.astype(jnp.float32)
    if b_pad != batch:
        x_in = jnp.zeros((b_pad, input_size), jnp.float32).at[:batch].set(x_in)

    y = pl.pallas_call(
        _make_kernel(input_size),
        out_shape=jax.ShapeDtypeStruct((1, b_pad), jnp.float32),
        grid=(b_pad // tile_b,),
        in_specs=[
            pl.BlockSpec((tile_b, input_size), lambda i: (i, 0)),   # x, natural width
            pl.BlockSpec(W.shape, lambda i: (0, 0)),                # packed weight slab
            pl.BlockSpec(B.shape, lambda i: (0, 0)),                # bias / last-layer slab
        ],
        out_specs=pl.BlockSpec((1, tile_b), lambda i: (0, i)),      # lane-dense over batch
        compiler_params=pltpu.CompilerParams(
            dimension_semantics=("parallel",)),
    )(x_in, W, B)

    return y[0, :batch].reshape(batch, 1)


# --------------------------------------------------------------------------
# Deterministic synthetic parameters (shapes match the PyTorch module).
# --------------------------------------------------------------------------
def init_params(key, input_size):
    params = []
    dims = [input_size] + HIDDEN
    keys = jax.random.split(key, 16)
    ki = 0
    for li in range(4):
        d_in, d_out = dims[li], dims[li + 1]
        scale = 1.0 / jnp.sqrt(jnp.float32(d_in))
        w = jax.random.uniform(keys[ki], (d_in, d_out), jnp.float32, -scale, scale); ki += 1
        b = jax.random.uniform(keys[ki], (1, d_out), jnp.float32, -scale, scale); ki += 1
        gamma = jax.random.uniform(keys[ki], (1, d_out), jnp.float32, 0.8, 1.2); ki += 1
        beta = 0.1 * jax.random.normal(keys[ki], (1, d_out), jnp.float32); ki += 1
        rmean = 0.05 * jax.random.normal(jax.random.fold_in(keys[ki], 1), (1, d_out), jnp.float32)
        rvar = jax.random.uniform(jax.random.fold_in(keys[ki], 2), (1, d_out), jnp.float32, 0.5, 1.5)
        params += [w, b, gamma, beta, rmean, rvar]
    d_in, d_out = HIDDEN[-1], OUT
    scale = 1.0 / jnp.sqrt(jnp.float32(d_in))
    kf = jax.random.split(keys[-1], 2)
    w5 = jax.random.uniform(kf[0], (d_in, d_out), jnp.float32, -scale, scale)
    b5 = jax.random.uniform(kf[1], (1, d_out), jnp.float32, -scale, scale)
    params += [w5, b5]
    return params


def reference_forward(x, params):
    """Pure-JAX reference of the same eval-mode forward pass (unfolded BN)."""
    h = x
    for li in range(4):
        w, b, g, be, m, v = params[6 * li: 6 * li + 6]
        h = h @ w + b
        h = (h - m) * lax.rsqrt(v + EPS) * g + be
        h = jnp.maximum(h, 0.0)
    w5, b5 = params[-2], params[-1]
    return h @ w5 + b5


if __name__ == "__main__":
    key = jax.random.PRNGKey(0)
    k_x, k_p = jax.random.split(key)

    input_size = 32
    params = init_params(k_p, input_size)

    # Small batch: single grid step, adaptive tile_b = 16 (no batch padding).
    x_small = jax.random.normal(k_x, (16, input_size), jnp.float32)
    y_small = jax.block_until_ready(laptop_price_predictor(x_small, params))
    ref_small = reference_forward(x_small, params)
    assert y_small.shape == (16, 1)
    assert jnp.allclose(y_small, ref_small, atol=1e-4, rtol=1e-4), (
        f"small-batch mismatch: max abs err {jnp.max(jnp.abs(y_small - ref_small))}")

    # Larger batch: exercises multi-tile grid + batch padding (tile_b=128, grid=3).
    x_big = jax.random.normal(jax.random.fold_in(k_x, 1), (300, input_size), jnp.float32)
    y_big = jax.block_until_ready(
        laptop_price_predictor(x_big, params, max_tile_b=128))
    ref_big = reference_forward(x_big, params)
    assert y_big.shape == (300, 1)
    assert jnp.allclose(y_big, ref_big, atol=1e-4, rtol=1e-4), (
        f"multi-tile mismatch: max abs err {jnp.max(jnp.abs(y_big - ref_big))}")

    print("KERNEL_OK")
</pallas_src>

<mosaic_0001>
module attributes {stable_mosaic.version = 11 : i64} {
  func.func @kernel(%arg0: i32, %arg1: memref<16x32xf32, #tpu.memory_space<vmem>>, %arg2: memref<256x128xf32, #tpu.memory_space<vmem>>, %arg3: memref<16x128xf32, #tpu.memory_space<vmem>>, %arg4: memref<1x16xf32, #tpu.memory_space<vmem>>) attributes {dimension_semantics = [#tpu.dimension_semantics<parallel>], iteration_bounds = array<i64: 1>, scalar_prefetch = 0 : i64, scratch_operands = 0 : i64, tpu.core_type = #tpu.core_type<tc>, window_params = [{transform_indices = @transform_0, window_bounds = array<i64: 16, 32>}, {pipeline_mode = #tpu.pipeline_mode<synchronous>, transform_indices = @transform_1, window_bounds = array<i64: 256, 128>}, {pipeline_mode = #tpu.pipeline_mode<synchronous>, transform_indices = @transform_2, window_bounds = array<i64: 16, 128>}, {transform_indices = @transform_3, window_bounds = array<i64: 1, 16>}]} {
    %c0 = arith.constant 0 : index
    %c0_0 = arith.constant 0 : index
    %0 = vector.load %arg1[%c0, %c0_0] : memref<16x32xf32, #tpu.memory_space<vmem>>, vector<16x32xf32>
    %c0_1 = arith.constant 0 : index
    %c0_2 = arith.constant 0 : index
    %1 = vector.load %arg2[%c0_1, %c0_2] : memref<256x128xf32, #tpu.memory_space<vmem>>, vector<32x128xf32>
    %cst = arith.constant dense<0.000000e+00> : vector<16x128xf32>
    %2 = tpu.matmul %0, %1, %cst {dimension_numbers = #tpu.dot_dimension_numbers<[1], [0], [0], [1], [0, 0, 1, 1], [], []>} : vector<16x32xf32>, vector<32x128xf32>, vector<16x128xf32> -> vector<16x128xf32>
    %c0_3 = arith.constant 0 : index
    %c0_4 = arith.constant 0 : index
    %3 = vector.load %arg3[%c0_3, %c0_4] : memref<16x128xf32, #tpu.memory_space<vmem>>, vector<1x128xf32>
    %4 = vector.broadcast %3 : vector<1x128xf32> to vector<16x128xf32>
    %5 = arith.addf %2, %4 : vector<16x128xf32>
    %cst_5 = arith.constant 0.000000e+00 : f32
    %6 = vector.broadcast %cst_5 : f32 to vector<16x128xf32>
    %7 = arith.maximumf %5, %6 : vector<16x128xf32>
    %c32 = arith.constant 32 : index
    %c0_6 = arith.constant 0 : index
    %8 = vector.load %arg2[%c32, %c0_6] : memref<256x128xf32, #tpu.memory_space<vmem>>, vector<128x128xf32>
    %cst_7 = arith.constant dense<0.000000e+00> : vector<16x128xf32>
    %9 = tpu.matmul %7, %8, %cst_7 {dimension_numbers = #tpu.dot_dimension_numbers<[1], [0], [0], [1], [0, 0, 1, 1], [], []>} : vector<16x128xf32>, vector<128x128xf32>, vector<16x128xf32> -> vector<16x128xf32>
    %c1 = arith.constant 1 : index
    %c0_8 = arith.constant 0 : index
    %10 = vector.load %arg3[%c1, %c0_8] : memref<16x128xf32, #tpu.memory_space<vmem>>, vector<1x128xf32>
    %11 = vector.broadcast %10 : vector<1x128xf32> to vector<16x128xf32>
    %12 = arith.addf %9, %11 : vector<16x128xf32>
    %cst_9 = arith.constant 0.000000e+00 : f32
    %13 = vector.broadcast %cst_9 : f32 to vector<16x128xf32>
    %14 = arith.maximumf %12, %13 : vector<16x128xf32>
    %15 = vector.extract_strided_slice %14 {offsets = [0, 0], sizes = [16, 64], strides = [1, 1]} : vector<16x128xf32> to vector<16x64xf32>
    %c160 = arith.constant 160 : index
    %c0_10 = arith.constant 0 : index
    %16 = vector.load %arg2[%c160, %c0_10] : memref<256x128xf32, #tpu.memory_space<vmem>>, vector<64x128xf32>
    %cst_11 = arith.constant dense<0.000000e+00> : vector<16x128xf32>
    %17 = tpu.matmul %15, %16, %cst_11 {dimension_numbers = #tpu.dot_dimension_numbers<[1], [0], [0], [1], [0, 0, 1, 1], [], []>} : vector<16x64xf32>, vector<64x128xf32>, vector<16x128xf32> -> vector<16x128xf32>
    %c2 = arith.constant 2 : index
    %c0_12 = arith.constant 0 : index
    %18 = vector.load %arg3[%c2, %c0_12] : memref<16x128xf32, #tpu.memory_space<vmem>>, vector<1x128xf32>
    %19 = vector.broadcast %18 : vector<1x128xf32> to vector<16x128xf32>
    %20 = arith.addf %17, %19 : vector<16x128xf32>
    %cst_13 = arith.constant 0.000000e+00 : f32
    %21 = vector.broadcast %cst_13 : f32 to vector<16x128xf32>
    %22 = arith.maximumf %20, %21 : vector<16x128xf32>
    %23 = vector.extract_strided_slice %22 {offsets = [0, 0], sizes = [16, 32], strides = [1, 1]} : vector<16x128xf32> to vector<16x32xf32>
    %c224 = arith.constant 224 : index
    %c0_14 = arith.constant 0 : index
    %24 = vector.load %arg2[%c224, %c0_14] : memref<256x128xf32, #tpu.memory_space<vmem>>, vector<32x128xf32>
    %cst_15 = arith.constant dense<0.000000e+00> : vector<16x128xf32>
    %25 = tpu.matmul %23, %24, %cst_15 {dimension_numbers = #tpu.dot_dimension_numbers<[1], [0], [0], [1], [0, 0, 1, 1], [], []>} : vector<16x32xf32>, vector<32x128xf32>, vector<16x128xf32> -> vector<16x128xf32>
    %c3 = arith.constant 3 : index
    %c0_16 = arith.constant 0 : index
    %26 = vector.load %arg3[%c3, %c0_16] : memref<16x128xf32, #tpu.memory_space<vmem>>, vector<1x128xf32>
    %27 = vector.broadcast %26 : vector<1x128xf32> to vector<16x128xf32>
    %28 = arith.addf %25, %27 : vector<16x128xf32>
    %cst_17 = arith.constant 0.000000e+00 : f32
    %29 = vector.broadcast %cst_17 : f32 to vector<16x128xf32>
    %30 = arith.maximumf %28, %29 : vector<16x128xf32>
    %c8 = arith.constant 8 : index
    %c0_18 = arith.constant 0 : index
    %31 = vector.load %arg3[%c8, %c0_18] : memref<16x128xf32, #tpu.memory_space<vmem>>, vector<8x128xf32>
    %cst_19 = arith.constant dense<0.000000e+00> : vector<8x16xf32>
    %32 = tpu.matmul %31, %30, %cst_19 {dimension_numbers = #tpu.dot_dimension_numbers<[1], [1], [0], [0], [0, 0, 1, 0], [], []>} : vector<8x128xf32>, vector<16x128xf32>, vector<8x16xf32> -> vector<8x16xf32>
    %33 = vector.extract_strided_slice %32 {offsets = [0, 0], sizes = [1, 16], strides = [1, 1]} : vector<8x16xf32> to vector<1x16xf32>
    %c4 = arith.constant 4 : index
    %c0_20 = arith.constant 0 : index
    %34 = vector.load %arg3[%c4, %c0_20] : memref<16x128xf32, #tpu.memory_space<vmem>>, vector<1x1xf32>
    %35 = vector.broadcast %34 : vector<1x1xf32> to vector<1x16xf32>
    %36 = arith.addf %33, %35 : vector<1x16xf32>
    %c0_21 = arith.constant 0 : index
    %c0_22 = arith.constant 0 : index
    %37 = vector.load %arg4[%c0_21, %c0_22] : memref<1x16xf32, #tpu.memory_space<vmem>>, vector<1x16xf32>
    tpu.vector_store %arg4[%c0_21, %c0_22], %36 {strides = array<i32>} : memref<1x16xf32, #tpu.memory_space<vmem>>, vector<1x16xf32>,
    return
  }
  func.func @transform_0(%arg0: i32) -> (i32, i32) {
    %c0_i32 = arith.constant 0 : i32
    %c0_i32_0 = arith.constant 0 : i32
    return %arg0, %c0_i32 : i32, i32
  }
  func.func @transform_1(%arg0: i32) -> (i32, i32) {
    %c0_i32 = arith.constant 0 : i32
    %c0_i32_0 = arith.constant 0 : i32
    %c0_i32_1 = arith.constant 0 : i32
    return %c0_i32, %c0_i32_0 : i32, i32
  }
  func.func @transform_2(%arg0: i32) -> (i32, i32) {
    %c0_i32 = arith.constant 0 : i32
    %c0_i32_0 = arith.constant 0 : i32
    %c0_i32_1 = arith.constant 0 : i32
    return %c0_i32, %c0_i32_0 : i32, i32
  }
  func.func @transform_3(%arg0: i32) -> (i32, i32) {
    %c0_i32 = arith.constant 0 : i32
    %c0_i32_0 = arith.constant 0 : i32
    return %c0_i32, %arg0 : i32, i32
  }
}

</mosaic_0001>

<llo_original>
// kernel: tpu_custom_call.1
$region0: #{tpu_custom_call.1}
  #allocation0 [shape = 'u32[]', space=smem, size = 0x4, offset = 0x4, fixed_abs, tag = 'smem constant byte address 0x4 - core index']
  #allocation1 [shape = 'u32[144,128]{1,0:T(1,128)}', space=vmem, size = 0x12000, scoped, tag = 'internal scratch']
  %s0 = inlined_call_operand.hbm [shape: f32[16,32], index: 0, kind: input, shape index: {}]
  %s1 = inlined_call_operand.hbm [shape: f32[256,128], index: 1, kind: input, shape index: {}]
  %s2 = inlined_call_operand.hbm [shape: f32[16,128], index: 2, kind: input, shape index: {}]
  %s3 = inlined_call_operand.hbm [shape: f32[1,16], index: 3, kind: output, shape index: {}]
  %s4 = sld [smem:[#allocation0]]
  $region34: #{tpu_custom_call.1} parent=0
    _
  %s6 = ssub.s32 1, %s4
  %s7 = scalar_select 0, %s6, %s4
  $region1: #{tpu_custom_call.1} parent=0
    #allocation2 [shape = 'u8[8192]{0}', space=vmem, size = 0x2000, scoped, tag = 'input window, operand 0, single buffered']
    #allocation3 [shape = 's32[1]{0}', space=sflag, size = 0x4, scoped, tag = 'scoped memory for tpu_custom_call.1']
    #allocation4 [shape = 's32[1]{0}', space=sflag, size = 0x4, scoped, tag = 'scoped memory for tpu_custom_call.1']
    #allocation5 [shape = 'u8[131072]{0}', space=vmem, size = 0x20000, scoped, tag = 'input window, operand 1, single buffered']
    #allocation6 [shape = 's32[1]{0}', space=sflag, size = 0x4, scoped, tag = 'scoped memory for tpu_custom_call.1']
    #allocation7 [shape = 'u8[8192]{0}', space=vmem, size = 0x2000, scoped, tag = 'input window, operand 2, single buffered']
    #allocation8 [shape = 'u8[512]{0}', space=vmem, size = 0x400, scoped, tag = 'output window, operand 0, single buffered']
    %8 = vsyncpa [#allocation3], 0
    %9 = vsyncpa [#allocation6], 0
    %10 = vsyncpa [#allocation4], 0
    // Predicated region
    $region2: #{tpu_custom_call.1} parent=1 // pred_check
      _
    $region3: #{tpu_custom_call.1} parent=1 // pred_check_branch
      %12 = sbr.rel (0) target = $region5
    $region4: #{tpu_custom_call.1} parent=1 // pred_region
      %s14 = ssub.s32 256, 256
      %15 = vsyncadd [#allocation3], %s14
      %s16 = sshll.u32 [#allocation2], 4
      %s17 = int_to_ptr.vmem [resolvable:$true] %s16
      %22 = dma.hbm_to_vmem [thread:$0]  %s0, 256, %s17, [#allocation3], 128, 128, 8
    $region5: #{tpu_custom_call.1} parent=1 // pred_fallthru
      _
    // Predicated region
    $region6: #{tpu_custom_call.1} parent=1 // pred_check
      _
    $region7: #{tpu_custom_call.1} parent=1 // pred_check_branch
      %24 = sbr.rel (0) target = $region9
    $region8: #{tpu_custom_call.1} parent=1 // pred_region
      %s26 = ssub.s32 4096, 4096
      %27 = vsyncadd [#allocation6], %s26
      %s28 = sshll.u32 [#allocation5], 4
      %s29 = int_to_ptr.vmem [resolvable:$true] %s28
      %34 = dma.hbm_to_vmem [thread:$0]  %s1, 4096, %s29, [#allocation6], 128, 128, 8
    $region9: #{tpu_custom_call.1} parent=1 // pred_fallthru
      _
    // Predicated region
    $region10: #{tpu_custom_call.1} parent=1 // pred_check
      _
    $region11: #{tpu_custom_call.1} parent=1 // pred_check_branch
      %36 = sbr.rel (0) target = $region13
    $region12: #{tpu_custom_call.1} parent=1 // pred_region
      %s38 = ssub.s32 256, 256
      %39 = vsyncadd [#allocation6], %s38
      %s40 = sshll.u32 [#allocation7], 4
      %s41 = int_to_ptr.vmem [resolvable:$true] %s40
      %46 = dma.hbm_to_vmem [thread:$0]  %s2, 256, %s41, [#allocation6], 128, 128, 8
    $region13: #{tpu_custom_call.1} parent=1 // pred_fallthru
      _
    // Predicated region
    $region14: #{tpu_custom_call.1} parent=1 // pred_check
      _
    $region15: #{tpu_custom_call.1} parent=1 // pred_check_branch
      %48 = sbr.rel (0) target = $region17
    $region16: #{tpu_custom_call.1} parent=1 // pred_region
      %49 = dma.done [#allocation3], 256
    $region17: #{tpu_custom_call.1} parent=1 // pred_fallthru
      _
    // Predicated region
    $region18: #{tpu_custom_call.1} parent=1 // pred_check
      _
    $region19: #{tpu_custom_call.1} parent=1 // pred_check_branch
      %51 = sbr.rel (0) target = $region21
    $region20: #{tpu_custom_call.1} parent=1 // pred_region
      %52 = dma.done [#allocation6], 4096
    $region21: #{tpu_custom_call.1} parent=1 // pred_fallthru
      _
    // Predicated region
    $region22: #{tpu_custom_call.1} parent=1 // pred_check
      _
    $region23: #{tpu_custom_call.1} parent=1 // pred_check_branch
      %54 = sbr.rel (0) target = $region25
    $region24: #{tpu_custom_call.1} parent=1 // pred_region
      %55 = dma.done [#allocation6], 256
    $region25: #{tpu_custom_call.1} parent=1 // pred_fallthru
      _
    %v56 = vld [vmem:[#allocation2] sm:$0xff]
    %v57 = vld [vmem:[#allocation2 + $0x8] sm:$0xff]
    %v58 = vld [vmem:[#allocation5] sm:$0xff]
    %v59 = vld [vmem:[#allocation5 + $0x8] sm:$0xff]
    %v60 = vld [vmem:[#allocation5 + $0x10] sm:$0xff]
    %v61 = vld [vmem:[#allocation5 + $0x18] sm:$0xff]
    %v62 = vld [vmem:[#allocation7] sm:$0x1]
    %v63 = vlaneseq
    %v64 = vshrl.u32 %v63, 7
    %v65 = vsub.s32 0, %v64
    %v66 = vrot.slane %v62, %v65
    %vm67 = vcmask 261120
    %v69 = vsel %vm67, %v56, 0
    %v72 = vsel %vm67, %v57, 0
    %74 = vmatprep.subr.mxu0 0.0
    %75 = vmatpush1.msra.mxu0 %v58
    %76 = vmatprep.subr.mxu0 0.0
    %77 = vmatpush1.msra.mxu0 %v59
    %78 = vmatprep.subr.mxu0 0.0
    %79 = vmatpush1.msra.mxu0 %v60
    %80 = vmatprep.subr.mxu0 0.0
    %81 = vmatpush1.msra.mxu0 %v61
    %82 = vmatprep.subr.mxu0 0.0
    %83 = vmatpush1.msra.mxu0 0.0
    %84 = vmatprep.subr.mxu0 0.0
    %85 = vmatpush1.msra.mxu0 0.0
    %86 = vmatprep.subr.mxu0 0.0
    %87 = vmatpush1.msra.mxu0 0.0
    %88 = vmatprep.subr.mxu0 0.0
    %89 = vmatpush1.msra.mxu0 0.0
    %90 = vmatprep.subr.mxu0 0.0
    %91 = vmatpush1.msra.mxu0 0.0
    %92 = vmatprep.subr.mxu0 0.0
    %93 = vmatpush1.msra.mxu0 0.0
    %94 = vmatprep.subr.mxu0 0.0
    %95 = vmatpush1.msra.mxu0 0.0
    %96 = vmatprep.subr.mxu0 0.0
    %97 = vmatpush1.msra.mxu0 0.0
    %98 = vmatprep.subr.mxu0 0.0
    %99 = vmatpush1.msra.mxu0 0.0
    %100 = vmatprep.subr.mxu0 0.0
    %101 = vmatpush1.msra.mxu0 0.0
    %102 = vmatprep.subr.mxu0 0.0
    %103 = vmatpush1.msra.mxu0 0.0
    %104 = vmatprep.subr.mxu0 0.0
    %105 = vmatpush1.msra.mxu0 0.0
    %106 = vmatprep.subr.mxu0 0.0
    %107 = vmatpush1.msra.mxu0 0.0
    %108 = vmatprep.subr.mxu0 0.0
    %109 = vmatpush1.msra.mxu0 0.0
    %110 = vmatprep.subr.mxu0 0.0
    %111 = vmatpush1.msra.mxu0 0.0
    %112 = vmatprep.subr.mxu0 0.0
    %113 = vmatpush1.msra.mxu0 0.0
    %114 = vmatprep.subr.mxu0 0.0
    %115 = vmatpush1.msra.mxu0 0.0
    %116 = vmatprep.subr.mxu0 0.0
    %117 = vmatpush1.msra.mxu0 0.0
    %118 = vmatprep.subr.mxu0 0.0
    %119 = vmatpush1.msra.mxu0 0.0
    %120 = vmatprep.subr.mxu0 0.0
    %121 = vmatpush1.msra.mxu0 0.0
    %122 = vmatprep.subr.mxu0 0.0
    %123 = vmatpush1.msra.mxu0 0.0
    %124 = vmatprep.subr.mxu0 0.0
    %125 = vmatpush1.msra.mxu0 0.0
    %126 = vmatprep.subr.mxu0 0.0
    %127 = vmatpush1.msra.mxu0 0.0
    %128 = vmatprep.subr.mxu0 0.0
    %129 = vmatpush1.msra.mxu0 0.0
    %130 = vmatprep.subr.mxu0 0.0
    %131 = vmatpush1.msra.mxu0 0.0
    %132 = vmatprep.subr.mxu0 0.0
    %133 = vmatpush1.msra.mxu0 0.0
    %134 = vmatprep.subr.mxu0 0.0
    %135 = vmatpush1.msra.mxu0 0.0
    %136 = vmatprep.subr.mxu0 0.0
    %137 = vmatpush1.msra.mxu0 0.0
    %138 = vmatprep.mubr.f32.mxu0 0.0
    %139 = vmatmul.mubr.f32.gmra.mrb[0].mxu0 %v69
    %v140 = vpop.f32.mrb[0].mxu0
    %v141 = vadd.f32 %v66, %v140
    %v142 = vpop.f32.mrb[0].mxu0
    %143 = vmatprep.mubr.f32.mxu0 0.0
    %144 = vmatmul.mubr.f32.gmra.mrb[0].mxu0 %v72
    %v145 = vpop.f32.mrb[0].mxu0
    %v146 = vadd.f32 %v66, %v145
    %v147 = vpop.f32.mrb[0].mxu0
    %148 = vdwg.mxu0
    %v149 = vmax.f32 %v141, 0.0
    %v150 = vmax.f32 %v146, 0.0
    %v151 = vld [vmem:[#allocation5 + $0x20] sm:$0xff]
    %v152 = vld [vmem:[#allocation5 + $0x28] sm:$0xff]
    %v153 = vld [vmem:[#allocation5 + $0x30] sm:$0xff]
    %v154 = vld [vmem:[#allocation5 + $0x38] sm:$0xff]
    %v155 = vld [vmem:[#allocation5 + $0x40] sm:$0xff]
    %v156 = vld [vmem:[#allocation5 + $0x48] sm:$0xff]
    %v157 = vld [vmem:[#allocation5 + $0x50] sm:$0xff]
    %v158 = vld [vmem:[#allocation5 + $0x58] sm:$0xff]
    %v159 = vld [vmem:[#allocation5 + $0x60] sm:$0xff]
    %v160 = vld [vmem:[#allocation5 + $0x68] sm:$0xff]
    %v161 = vld [vmem:[#allocation5 + $0x70] sm:$0xff]
    %v162 = vld [vmem:[#allocation5 + $0x78] sm:$0xff]
    %v163 = vld [vmem:[#allocation5 + $0x80] sm:$0xff]
    %v164 = vld [vmem:[#allocation5 + $0x88] sm:$0xff]
    %v165 = vld [vmem:[#allocation5 + $0x90] sm:$0xff]
    %v166 = vld [vmem:[#allocation5 + $0x98] sm:$0xff]
    %v167 = vld [vmem:[#allocation7 + $0x1] sm:$0x1]
    %v168 = vlaneseq
    %v169 = vshrl.u32 %v168, 7
    %v170 = vsub.s32 0, %v169
    %v171 = vrot.slane %v167, %v170
    %172 = vmatprep.subr.mxu0 0.0
    %173 = vmatpush1.msra.mxu0 %v151
    %174 = vmatprep.subr.mxu0 0.0
    %175 = vmatpush1.msra.mxu0 %v152
    %176 = vmatprep.subr.mxu0 0.0
    %177 = vmatpush1.msra.mxu0 %v153
    %178 = vmatprep.subr.mxu0 0.0
    %179 = vmatpush1.msra.mxu0 %v154
    %180 = vmatprep.subr.mxu0 0.0
    %181 = vmatpush1.msra.mxu0 %v155
    %182 = vmatprep.subr.mxu0 0.0
    %183 = vmatpush1.msra.mxu0 %v156
    %184 = vmatprep.subr.mxu0 0.0
    %185 = vmatpush1.msra.mxu0 %v157
    %186 = vmatprep.subr.mxu0 0.0
    %187 = vmatpush1.msra.mxu0 %v158
    %188 = vmatprep.subr.mxu0 0.0
    %189 = vmatpush1.msra.mxu0 %v159
    %190 = vmatprep.subr.mxu0 0.0
    %191 = vmatpush1.msra.mxu0 %v160
    %192 = vmatprep.subr.mxu0 0.0
    %193 = vmatpush1.msra.mxu0 %v161
    %194 = vmatprep.subr.mxu0 0.0
    %195 = vmatpush1.msra.mxu0 %v162
    %196 = vmatprep.subr.mxu0 0.0
    %197 = vmatpush1.msra.mxu0 %v163
    %198 = vmatprep.subr.mxu0 0.0
    %199 = vmatpush1.msra.mxu0 %v164
    %200 = vmatprep.subr.mxu0 0.0
    %201 = vmatpush1.msra.mxu0 %v165
    %202 = vmatprep.subr.mxu0 0.0
    %203 = vmatpush1.msra.mxu0 %v166
    %204 = vmatprep.subr.mxu0 0.0
    %205 = vmatpush1.msra.mxu0 0.0
    %206 = vmatprep.subr.mxu0 0.0
    %207 = vmatpush1.msra.mxu0 0.0
    %208 = vmatprep.subr.mxu0 0.0
    %209 = vmatpush1.msra.mxu0 0.0
    %210 = vmatprep.subr.mxu0 0.0
    %211 = vmatpush1.msra.mxu0 0.0
    %212 = vmatprep.subr.mxu0 0.0
    %213 = vmatpush1.msra.mxu0 0.0
    %214 = vmatprep.subr.mxu0 0.0
    %215 = vmatpush1.msra.mxu0 0.0
    %216 = vmatprep.subr.mxu0 0.0
    %217 = vmatpush1.msra.mxu0 0.0
    %218 = vmatprep.subr.mxu0 0.0
    %219 = vmatpush1.msra.mxu0 0.0
    %220 = vmatprep.subr.mxu0 0.0
    %221 = vmatpush1.msra.mxu0 0.0
    %222 = vmatprep.subr.mxu0 0.0
    %223 = vmatpush1.msra.mxu0 0.0
    %224 = vmatprep.subr.mxu0 0.0
    %225 = vmatpush1.msra.mxu0 0.0
    %226 = vmatprep.subr.mxu0 0.0
    %227 = vmatpush1.msra.mxu0 0.0
    %228 = vmatprep.subr.mxu0 0.0
    %229 = vmatpush1.msra.mxu0 0.0
    %230 = vmatprep.subr.mxu0 0.0
    %231 = vmatpush1.msra.mxu0 0.0
    %232 = vmatprep.subr.mxu0 0.0
    %233 = vmatpush1.msra.mxu0 0.0
    %234 = vmatprep.subr.mxu0 0.0
    %235 = vmatpush1.msra.mxu0 0.0
    %236 = vmatprep.mubr.f32.mxu0 0.0
    %237 = vmatmul.mubr.f32.gmra.mrb[0].mxu0 %v149
    %v238 = vpop.f32.mrb[0].mxu0
    %v239 = vadd.f32 %v171, %v238
    %v240 = vpop.f32.mrb[0].mxu0
    %241 = vmatprep.mubr.f32.mxu0 0.0
    %242 = vmatmul.mubr.f32.gmra.mrb[0].mxu0 %v150
    %v243 = vpop.f32.mrb[0].mxu0
    %v244 = vadd.f32 %v171, %v243
    %v245 = vpop.f32.mrb[0].mxu0
    %246 = vdwg.mxu0
    %v247 = vmax.f32 %v239, 0.0
    %v248 = vmax.f32 %v244, 0.0
    %v249 = vld [vmem:[#allocation5 + $0xa0] sm:$0xff]
    %v250 = vld [vmem:[#allocation5 + $0xa8] sm:$0xff]
    %v251 = vld [vmem:[#allocation5 + $0xb0] sm:$0xff]
    %v252 = vld [vmem:[#allocation5 + $0xb8] sm:$0xff]
    %v253 = vld [vmem:[#allocation5 + $0xc0] sm:$0xff]
    %v254 = vld [vmem:[#allocation5 + $0xc8] sm:$0xff]
    %v255 = vld [vmem:[#allocation5 + $0xd0] sm:$0xff]
    %v256 = vld [vmem:[#allocation5 + $0xd8] sm:$0xff]
    %v257 = vld [vmem:[#allocation7 + $0x2] sm:$0x1]
    %v258 = vlaneseq
    %v259 = vshrl.u32 %v258, 7
    %v260 = vsub.s32 0, %v259
    %v261 = vrot.slane %v257, %v260
    %vm262 = vcmask 523264
    %v264 = vsel %vm262, %v247, 0
    %v267 = vsel %vm262, %v248, 0
    %269 = vmatprep.subr.mxu0 0.0
    %270 = vmatpush1.msra.mxu0 %v249
    %271 = vmatprep.subr.mxu0 0.0
    %272 = vmatpush1.msra.mxu0 %v250
    %273 = vmatprep.subr.mxu0 0.0
    %274 = vmatpush1.msra.mxu0 %v251
    %275 = vmatprep.subr.mxu0 0.0
    %276 = vmatpush1.msra.mxu0 %v252
    %277 = vmatprep.subr.mxu0 0.0
    %278 = vmatpush1.msra.mxu0 %v253
    %279 = vmatprep.subr.mxu0 0.0
    %280 = vmatpush1.msra.mxu0 %v254
    %281 = vmatprep.subr.mxu0 0.0
    %282 = vmatpush1.msra.mxu0 %v255
    %283 = vmatprep.subr.mxu0 0.0
    %284 = vmatpush1.msra.mxu0 %v256
    %285 = vmatprep.subr.mxu0 0.0
    %286 = vmatpush1.msra.mxu0 0.0
    %287 = vmatprep.subr.mxu0 0.0
    %288 = vmatpush1.msra.mxu0 0.0
    %289 = vmatprep.subr.mxu0 0.0
    %290 = vmatpush1.msra.mxu0 0.0
    %291 = vmatprep.subr.mxu0 0.0
    %292 = vmatpush1.msra.mxu0 0.0
    %293 = vmatprep.subr.mxu0 0.0
    %294 = vmatpush1.msra.mxu0 0.0
    %295 = vmatprep.subr.mxu0 0.0
    %296 = vmatpush1.msra.mxu0 0.0
    %297 = vmatprep.subr.mxu0 0.0
    %298 = vmatpush1.msra.mxu0 0.0
    %299 = vmatprep.subr.mxu0 0.0
    %300 = vmatpush1.msra.mxu0 0.0
    %301 = vmatprep.subr.mxu0 0.0
    %302 = vmatpush1.msra.mxu0 0.0
    %303 = vmatprep.subr.mxu0 0.0
    %304 = vmatpush1.msra.mxu0 0.0
    %305 = vmatprep.subr.mxu0 0.0
    %306 = vmatpush1.msra.mxu0 0.0
    %307 = vmatprep.subr.mxu0 0.0
    %308 = vmatpush1.msra.mxu0 0.0
    %309 = vmatprep.subr.mxu0 0.0
    %310 = vmatpush1.msra.mxu0 0.0
    %311 = vmatprep.subr.mxu0 0.0
    %312 = vmatpush1.msra.mxu0 0.0
    %313 = vmatprep.subr.mxu0 0.0
    %314 = vmatpush1.msra.mxu0 0.0
    %315 = vmatprep.subr.mxu0 0.0
    %316 = vmatpush1.msra.mxu0 0.0
    %317 = vmatprep.subr.mxu0 0.0
    %318 = vmatpush1.msra.mxu0 0.0
    %319 = vmatprep.subr.mxu0 0.0
    %320 = vmatpush1.msra.mxu0 0.0
    %321 = vmatprep.subr.mxu0 0.0
    %322 = vmatpush1.msra.mxu0 0.0
    %323 = vmatprep.subr.mxu0 0.0
    %324 = vmatpush1.msra.mxu0 0.0
    %325 = vmatprep.subr.mxu0 0.0
    %326 = vmatpush1.msra.mxu0 0.0
    %327 = vmatprep.subr.mxu0 0.0
    %328 = vmatpush1.msra.mxu0 0.0
    %329 = vmatprep.subr.mxu0 0.0
    %330 = vmatpush1.msra.mxu0 0.0
    %331 = vmatprep.subr.mxu0 0.0
    %332 = vmatpush1.msra.mxu0 0.0
    %333 = vmatprep.mubr.f32.mxu0 0.0
    %334 = vmatmul.mubr.f32.gmra.mrb[0].mxu0 %v264
    %v335 = vpop.f32.mrb[0].mxu0
    %v336 = vadd.f32 %v261, %v335
    %v337 = vpop.f32.mrb[0].mxu0
    %338 = vmatprep.mubr.f32.mxu0 0.0
    %339 = vmatmul.mubr.f32.gmra.mrb[0].mxu0 %v267
    %v340 = vpop.f32.mrb[0].mxu0
    %v341 = vadd.f32 %v261, %v340
    %v342 = vpop.f32.mrb[0].mxu0
    %343 = vdwg.mxu0
    %v344 = vmax.f32 %v336, 0.0
    %v345 = vmax.f32 %v341, 0.0
    %v346 = vld [vmem:[#allocation5 + $0xe0] sm:$0xff]
    %v347 = vld [vmem:[#allocation5 + $0xe8] sm:$0xff]
    %v348 = vld [vmem:[#allocation5 + $0xf0] sm:$0xff]
    %v349 = vld [vmem:[#allocation5 + $0xf8] sm:$0xff]
    %v350 = vld [vmem:[#allocation7 + $0x3] sm:$0x1]
    %v351 = vlaneseq
    %v352 = vshrl.u32 %v351, 7
    %v353 = vsub.s32 0, %v352
    %v354 = vrot.slane %v350, %v353
    %v356 = vsel %vm67, %v344, 0
    %v359 = vsel %vm67, %v345, 0
    %361 = vmatprep.subr.mxu0 0.0
    %362 = vmatpush1.msra.mxu0 %v346
    %363 = vmatprep.subr.mxu0 0.0
    %364 = vmatpush1.msra.mxu0 %v347
    %365 = vmatprep.subr.mxu0 0.0
    %366 = vmatpush1.msra.mxu0 %v348
    %367 = vmatprep.subr.mxu0 0.0
    %368 = vmatpush1.msra.mxu0 %v349
    %369 = vmatprep.subr.mxu0 0.0
    %370 = vmatpush1.msra.mxu0 0.0
    %371 = vmatprep.subr.mxu0 0.0
    %372 = vmatpush1.msra.mxu0 0.0
    %373 = vmatprep.subr.mxu0 0.0
    %374 = vmatpush1.msra.mxu0 0.0
    %375 = vmatprep.subr.mxu0 0.0
    %376 = vmatpush1.msra.mxu0 0.0
    %377 = vmatprep.subr.mxu0 0.0
    %378 = vmatpush1.msra.mxu0 0.0
    %379 = vmatprep.subr.mxu0 0.0
    %380 = vmatpush1.msra.mxu0 0.0
    %381 = vmatprep.subr.mxu0 0.0
    %382 = vmatpush1.msra.mxu0 0.0
    %383 = vmatprep.subr.mxu0 0.0
    %384 = vmatpush1.msra.mxu0 0.0
    %385 = vmatprep.subr.mxu0 0.0
    %386 = vmatpush1.msra.mxu0 0.0
    %387 = vmatprep.subr.mxu0 0.0
    %388 = vmatpush1.msra.mxu0 0.0
    %389 = vmatprep.subr.mxu0 0.0
    %390 = vmatpush1.msra.mxu0 0.0
    %391 = vmatprep.subr.mxu0 0.0
    %392 = vmatpush1.msra.mxu0 0.0
    %393 = vmatprep.subr.mxu0 0.0
    %394 = vmatpush1.msra.mxu0 0.0
    %395 = vmatprep.subr.mxu0 0.0
    %396 = vmatpush1.msra.mxu0 0.0
    %397 = vmatprep.subr.mxu0 0.0
    %398 = vmatpush1.msra.mxu0 0.0
    %399 = vmatprep.subr.mxu0 0.0
    %400 = vmatpush1.msra.mxu0 0.0
    %401 = vmatprep.subr.mxu0 0.0
    %402 = vmatpush1.msra.mxu0 0.0
    %403 = vmatprep.subr.mxu0 0.0
    %404 = vmatpush1.msra.mxu0 0.0
    %405 = vmatprep.subr.mxu0 0.0
    %406 = vmatpush1.msra.mxu0 0.0
    %407 = vmatprep.subr.mxu0 0.0
    %408 = vmatpush1.msra.mxu0 0.0
    %409 = vmatprep.subr.mxu0 0.0
    %410 = vmatpush1.msra.mxu0 0.0
    %411 = vmatprep.subr.mxu0 0.0
    %412 = vmatpush1.msra.mxu0 0.0
    %413 = vmatprep.subr.mxu0 0.0
    %414 = vmatpush1.msra.mxu0 0.0
    %415 = vmatprep.subr.mxu0 0.0
    %416 = vmatpush1.msra.mxu0 0.0
    %417 = vmatprep.subr.mxu0 0.0
    %418 = vmatpush1.msra.mxu0 0.0
    %419 = vmatprep.subr.mxu0 0.0
    %420 = vmatpush1.msra.mxu0 0.0
    %421 = vmatprep.subr.mxu0 0.0
    %422 = vmatpush1.msra.mxu0 0.0
    %423 = vmatprep.subr.mxu0 0.0
    %424 = vmatpush1.msra.mxu0 0.0
    %425 = vmatprep.mubr.f32.mxu0 0.0
    %426 = vmatmul.mubr.f32.gmra.mrb[0].mxu0 %v356
    %v427 = vpop.f32.mrb[0].mxu0
    %v428 = vadd.f32 %v354, %v427
    %v429 = vpop.f32.mrb[0].mxu0
    %430 = vmatprep.mubr.f32.mxu0 0.0
    %431 = vmatmul.mubr.f32.gmra.mrb[0].mxu0 %v359
    %v432 = vpop.f32.mrb[0].mxu0
    %v433 = vadd.f32 %v354, %v432
    %v434 = vpop.f32.mrb[0].mxu0
    %435 = vdwg.mxu0
    %v436 = vmax.f32 %v428, 0.0
    %v437 = vmax.f32 %v433, 0.0
    %v438 = vld [vmem:[#allocation7 + $0x8] sm:$0xff]
    %439 = vmatprep.subr.mxu0 0.0
    %440 = vmatpush1.xpose.msra.mxu0 %v436
    %441 = vmatprep.subr.mxu0 0.0
    %442 = vmatpush1.xpose.msra.mxu0 %v437
    %443 = vmatprep.subr.mxu0 0.0
    %444 = vmatpush1.xpose.msra.mxu0 0.0
    %445 = vmatprep.subr.mxu0 0.0
    %446 = vmatpush1.xpose.msra.mxu0 0.0
    %447 = vmatprep.subr.mxu0 0.0
    %448 = vmatpush1.xpose.msra.mxu0 0.0
    %449 = vmatprep.subr.mxu0 0.0
    %450 = vmatpush1.xpose.msra.mxu0 0.0
    %451 = vmatprep.subr.mxu0 0.0
    %452 = vmatpush1.xpose.msra.mxu0 0.0
    %453 = vmatprep.subr.mxu0 0.0
    %454 = vmatpush1.xpose.msra.mxu0 0.0
    %455 = vmatprep.subr.mxu0 0.0
    %456 = vmatpush1.xpose.msra.mxu0 0.0
    %457 = vmatprep.subr.mxu0 0.0
    %458 = vmatpush1.xpose.msra.mxu0 0.0
    %459 = vmatprep.subr.mxu0 0.0
    %460 = vmatpush1.xpose.msra.mxu0 0.0
    %461 = vmatprep.subr.mxu0 0.0
    %462 = vmatpush1.xpose.msra.mxu0 0.0
    %463 = vmatprep.subr.mxu0 0.0
    %464 = vmatpush1.xpose.msra.mxu0 0.0
    %465 = vmatprep.subr.mxu0 0.0
    %466 = vmatpush1.xpose.msra.mxu0 0.0
    %467 = vmatprep.subr.mxu0 0.0
    %468 = vmatpush1.xpose.msra.mxu0 0.0
    %469 = vmatprep.subr.mxu0 0.0
    %470 = vmatpush1.xpose.msra.mxu0 0.0
    %471 = vmatprep.subr.mxu0 0.0
    %472 = vmatpush1.xpose.msra.mxu0 0.0
    %473 = vmatprep.subr.mxu0 0.0
    %474 = vmatpush1.xpose.msra.mxu0 0.0
    %475 = vmatprep.subr.mxu0 0.0
    %476 = vmatpush1.xpose.msra.mxu0 0.0
    %477 = vmatprep.subr.mxu0 0.0
    %478 = vmatpush1.xpose.msra.mxu0 0.0
    %479 = vmatprep.subr.mxu0 0.0
    %480 = vmatpush1.xpose.msra.mxu0 0.0
    %481 = vmatprep.subr.mxu0 0.0
    %482 = vmatpush1.xpose.msra.mxu0 0.0
    %483 = vmatprep.subr.mxu0 0.0
    %484 = vmatpush1.xpose.msra.mxu0 0.0
    %485 = vmatprep.subr.mxu0 0.0
    %486 = vmatpush1.xpose.msra.mxu0 0.0
    %487 = vmatprep.subr.mxu0 0.0
    %488 = vmatpush1.xpose.msra.mxu0 0.0
    %489 = vmatprep.subr.mxu0 0.0
    %490 = vmatpush1.xpose.msra.mxu0 0.0
    %491 = vmatprep.subr.mxu0 0.0
    %492 = vmatpush1.xpose.msra.mxu0 0.0
    %493 = vmatprep.subr.mxu0 0.0
    %494 = vmatpush1.xpose.msra.mxu0 0.0
    %495 = vmatprep.subr.mxu0 0.0
    %496 = vmatpush1.xpose.msra.mxu0 0.0
    %497 = vmatprep.subr.mxu0 0.0
    %498 = vmatpush1.xpose.msra.mxu0 0.0
    %499 = vmatprep.subr.mxu0 0.0
    %500 = vmatpush1.xpose.msra.mxu0 0.0
    %501 = vmatprep.subr.mxu0 0.0
    %502 = vmatpush1.xpose.msra.mxu0 0.0
    %503 = vmatprep.mubr.f32.mxu0 0.0
    %504 = vmatmul.mubr.f32.gmra.mrb[0].mxu0 %v438
    %v505 = vpop.f32.mrb[0].mxu0
    %v506 = vadd.f32 0.0, %v505
    %v507 = vpop.f32.mrb[0].mxu0
    %508 = vdwg.mxu0
    %v509 = vld [vmem:[#allocation7 + $0x4] sm:$0x1]
    %511 = vset.pattern.permute.xlu0 0
    %512 = vperm.xlu0 %511, %v509
    %v513 = vpop.permute.xlu0 %512
    %v515 = vadd.f32 %v506, %v513
    %vm516 = vcmask 122880
    %517 = vst.msk [vmem:[#allocation8] sm:$0x1] %vm516, %v515
    // Predicated region
    $region26: #{tpu_custom_call.1} parent=1 // pred_check
      _
    $region27: #{tpu_custom_call.1} parent=1 // pred_check_branch
      %519 = sbr.rel (0) target = $region29
    $region28: #{tpu_custom_call.1} parent=1 // pred_region
      %s521 = ssub.s32 16, 16
      %522 = vsyncadd [#allocation4], %s521
      %s524 = sshll.u32 [#allocation8], 4
      %s525 = int_to_ptr.vmem [resolvable:$true] %s524
      %527 = dma.vmem_to_hbm [thread:$0]  %s525, 16, %s3, [#allocation4]
    $region29: #{tpu_custom_call.1} parent=1 // pred_fallthru
      _
    // Predicated region
    $region30: #{tpu_custom_call.1} parent=1 // pred_check
      _
    $region31: #{tpu_custom_call.1} parent=1 // pred_check_branch
      %529 = sbr.rel (0) target = $region33
    $region32: #{tpu_custom_call.1} parent=1 // pred_region
      %530 = dma.done [#allocation4], 16
    $region33: #{tpu_custom_call.1} parent=1 // pred_fallthru
      _
    %531 = vsyncpa [#allocation3], 1
    %532 = vsyncpa [#allocation6], 1
    %533 = vsyncpa [#allocation4], 1

</llo_original>
